<compile_context>
chip_gen: v7x
topology: tpu7x:2x2x1
jax: 0.10.0
libtpu: 0.0.40
codegen_flags: <defaults>
</compile_context>

<pallas_src>
import functools

import jax
import jax.numpy as jnp
from jax.experimental import pallas as pl
from jax.experimental.pallas import tpu as pltpu


_MiB = 1024 * 1024
_MAX_LANES = 4096            # lane-dense width cap (multiple of 128)
_MIN_GRID_STEPS = 4          # enough steps for DMA/compute overlap on large arrays
_MIN_PIPELINE_BYTES = 1 * _MiB  # below this, one block beats paying per-step overhead

# Per generation: (per-buffer tile budget, explicit vmem_limit_bytes, prefer even grid steps)
_GEN_BUDGET = {
    "v5e": (2 * _MiB, 16 * _MiB, False),
    "v6e": (4 * _MiB, 32 * _MiB, False),
    "v7x": (6 * _MiB, 40 * _MiB, True),   # 2 bufs x (in+out) x 6 MiB = 24 MiB << 40 MiB
    "unknown": (2 * _MiB, 32 * _MiB, False),
}


@functools.lru_cache(maxsize=1)
def _chip_generation() -> str:
    """Best-effort TPU generation detection via device_kind; safe defaults otherwise."""
    try:
        kind = jax.devices()[0].device_kind.lower()
    except Exception:  # pragma: no cover - non-TPU / init failure
        return "unknown"
    if "v5 lite" in kind or "v5e" in kind or "v5litepod" in kind:
        return "v5e"
    if "v6" in kind:
        return "v6e"
    if "v7" in kind:
        return "v7x"
    return "unknown"


def _sublane_align(dtype_bytes: int) -> int:
    # f32 packs 8 rows/vreg, bf16/f16 16, int8/fp8 32 — align row tiles to the native
    # packed tile so the store path stays unmasked.
    return max(8, 32 // max(1, dtype_bytes))


def _compute_dtype(x_dtype, gen):
    dt = jnp.dtype(x_dtype)
    if gen in ("v6e", "v7x") and dt in (jnp.dtype(jnp.bfloat16), jnp.dtype(jnp.float16)):
        return dt  # bf16/f16 VALU available: multiply natively, halve vreg pressure
    # TODO(synk): integer inputs compute in f32 then cast back to the input dtype
    #             (PyTorch would promote to float); fine for float activations.
    return jnp.dtype(jnp.float32)


def _choose_cols(n: int):
    """Largest multiple-of-128 divisor of n, capped at _MAX_LANES lanes."""
    max_m = min(_MAX_LANES, n) // 128
    for m in range(max_m, 0, -1):
        c = 128 * m
        if n % c == 0:
            return c
    return None


def _choose_tile_rows(rows, cols, dtype_bytes, tile_bytes, align, prefer_even_steps):
    """Pick a sublane-aligned row-tile size near the per-generation byte budget."""
    if rows <= align:
        return rows  # full-extent sublane block bypasses the divisibility rule

    target = max(align, (tile_bytes // (cols * dtype_bytes)) // align * align)
    tr = max(align, min(target, (rows // align) * align))
    if rows * cols * dtype_bytes >= _MIN_PIPELINE_BYTES:
        # Keep a few grid steps so BlockSpec double-buffering can overlap DMA/compute.
        while tr > align and pl.cdiv(rows, tr) < _MIN_GRID_STEPS:
            tr = max(align, (tr // 2) // align * align)

    def score(t):
        steps = pl.cdiv(rows, t)
        exact = rows % t == 0                      # no masked tail block
        even = steps % 2 == 0 or steps == 1        # balanced across v7x's two TCs
        return (
            0 if (even or not prefer_even_steps) else 1,
            0 if exact else 1,
            -t,                                    # otherwise: biggest tile wins
        )

    lo = max(align, tr // 2)
    candidates = range((tr // align) * align, lo - 1, -align)
    return min(candidates, key=score, default=tr)


def _const_scale_kernel(x_ref, o_ref, *, scale, compute_dtype):
    x = x_ref[...].astype(compute_dtype)
    o_ref[...] = (x * jnp.asarray(scale, dtype=compute_dtype)).astype(o_ref.dtype)


def _learnable_scale_kernel(scale_ref, x_ref, o_ref, *, compute_dtype):
    # scale_ref: (1,) f32 scalar-prefetch operand in SMEM; cast once per block.
    s = scale_ref[0].astype(compute_dtype)
    o_ref[...] = (x_ref[...].astype(compute_dtype) * s).astype(o_ref.dtype)


def multiply_by(x: jax.Array, scale_value) -> jax.Array:
    """Elementwise x * scale_value via a Pallas TPU kernel.

    x: any-shape array (NCHW in the original module). scale_value: Python float
    (non-learnable) or shape-(1,) f32 array (learnable Parameter).
    """
    orig_shape = x.shape
    orig_dtype = x.dtype
    n = x.size
    dtype_bytes = jnp.dtype(orig_dtype).itemsize

    gen = _chip_generation()
    tile_bytes, vmem_limit, prefer_even = _GEN_BUDGET.get(gen, _GEN_BUDGET["unknown"])
    align = _sublane_align(dtype_bytes)
    compute_dtype = _compute_dtype(orig_dtype, gen)

    flat = x.reshape(-1)
    cols = _choose_cols(n)
    padded_n = n
    if cols is None:
        # Rare fallback (element count not a multiple of 128): pad minimally to the
        # next lane multiple and slice back afterwards.
        # TODO(synk): handle the ragged tail in-kernel to avoid the pad/slice copies.
        pad = (-n) % 128
        flat = jnp.pad(flat, (0, pad))
        padded_n = n + pad
        cols = _choose_cols(padded_n)
    rows = padded_n // cols
    x2d = flat.reshape(rows, cols)
    tr = _choose_tile_rows(rows, cols, dtype_bytes, tile_bytes, align, prefer_even)

    grid = (pl.cdiv(rows, tr),)
    out_shape = jax.ShapeDtypeStruct((rows, cols), orig_dtype)
    cparams = pltpu.CompilerParams(
        dimension_semantics=("parallel",),
        vmem_limit_bytes=vmem_limit,
    )

    is_constant_scale = isinstance(scale_value, (int, float))

    if is_constant_scale:
        kernel = functools.partial(
            _const_scale_kernel, scale=float(scale_value), compute_dtype=compute_dtype
        )
        out2d = pl.pallas_call(
            kernel,
            out_shape=out_shape,
            grid_spec=pltpu.PrefetchScalarGridSpec(
                num_scalar_prefetch=0,
                grid=grid,
                in_specs=[pl.BlockSpec((tr, cols), lambda i: (i, 0))],
                out_specs=pl.BlockSpec((tr, cols), lambda i: (i, 0)),
            ),
            compiler_params=cparams,
        )(x2d)
    else:
        kernel = functools.partial(_learnable_scale_kernel, compute_dtype=compute_dtype)
        scale_arr = jnp.asarray(scale_value, dtype=jnp.float32).reshape(1)
        out2d = pl.pallas_call(
            kernel,
            out_shape=out_shape,
            grid_spec=pltpu.PrefetchScalarGridSpec(
                num_scalar_prefetch=1,
                grid=grid,
                # index_maps receive the scalar-prefetch ref as a trailing arg.
                in_specs=[pl.BlockSpec((tr, cols), lambda i, s: (i, 0))],
                out_specs=pl.BlockSpec((tr, cols), lambda i, s: (i, 0)),
            ),
            compiler_params=cparams,
        )(scale_arr, x2d)

    if padded_n != n:
        return out2d.reshape(-1)[:n].reshape(orig_shape)
    return out2d.reshape(orig_shape)


class MultiplyBy:
    """JAX/Pallas port of the PyTorch MultiplyBy module (forward pass)."""

    def __init__(self, scale_value: float = 5.0, learnable: bool = False):
        if learnable:
            # Same deterministic init as torch: Parameter(Tensor([scale_value])), kept in f32.
            self.scale_value = jnp.array([scale_value], dtype=jnp.float32)
        else:
            self.scale_value = float(scale_value)

    def __call__(self, x: jax.Array) -> jax.Array:
        return multiply_by(x, self.scale_value)


if __name__ == "__main__":
    key = jax.random.PRNGKey(0)
    # NCHW, small shapes consistent with the module.
    x = jax.random.normal(key, (2, 4, 16, 16), dtype=jnp.float32)

    # Non-learnable path (scale baked into the kernel as a constant).
    mod = MultiplyBy(scale_value=5.0, learnable=False)
    y = jax.block_until_ready(mod(x))

    # Learnable path (f32 Parameter routed through scalar prefetch / SMEM).
    mod_learn = MultiplyBy(scale_value=5.0, learnable=True)
    y2 = jax.block_until_ready(mod_learn(x))

    ref = x * 5.0
    assert y.shape == x.shape and y.dtype == x.dtype
    assert y2.shape == x.shape and y2.dtype == x.dtype
    assert jnp.allclose(y, ref, atol=1e-6), "mismatch vs reference (non-learnable)"
    assert jnp.allclose(y2, ref, atol=1e-6), "mismatch vs reference (learnable)"

    # bf16 path (native bf16 math on v6e/v7x, f32 on v5e).
    xb = x.astype(jnp.bfloat16)
    yb = jax.block_until_ready(mod(xb))
    assert yb.shape == xb.shape and yb.dtype == xb.dtype
    assert jnp.allclose(
        yb.astype(jnp.float32), xb.astype(jnp.float32) * 5.0, rtol=2e-2, atol=2e-2
    ), "mismatch vs reference (bf16)"

    # Fallback path: element count not a multiple of 128 (pads to next 128 only).
    xo = jax.random.normal(jax.random.PRNGKey(1), (3, 5, 7), dtype=jnp.float32)
    yo = jax.block_until_ready(mod(xo))
    assert yo.shape == xo.shape and yo.dtype == xo.dtype
    assert jnp.allclose(yo, xo * 5.0, atol=1e-6), "mismatch vs reference (ragged)"

    print("KERNEL_OK")
</pallas_src>

<mosaic_0001>
module attributes {stable_mosaic.version = 11 : i64} {
  func.func @_const_scale_kernel(%arg0: i32, %arg1: memref<1x2048xf32, #tpu.memory_space<vmem>>, %arg2: memref<1x2048xf32, #tpu.memory_space<vmem>>) attributes {dimension_semantics = [#tpu.dimension_semantics<parallel>], iteration_bounds = array<i64: 1>, scalar_prefetch = 0 : i64, scratch_operands = 0 : i64, tpu.core_type = #tpu.core_type<tc>, window_params = [{transform_indices = @transform_0, window_bounds = array<i64: 1, 2048>}, {transform_indices = @transform_1, window_bounds = array<i64: 1, 2048>}]} {
    %c0 = arith.constant 0 : index
    %c0_0 = arith.constant 0 : index
    %0 = vector.load %arg1[%c0, %c0_0] : memref<1x2048xf32, #tpu.memory_space<vmem>>, vector<1x2048xf32>
    %cst = arith.constant 5.000000e+00 : f32
    %1 = vector.broadcast %cst : f32 to vector<1x2048xf32>
    %2 = arith.mulf %0, %1 : vector<1x2048xf32>
    %c0_1 = arith.constant 0 : index
    %c0_2 = arith.constant 0 : index
    %3 = vector.load %arg2[%c0_1, %c0_2] : memref<1x2048xf32, #tpu.memory_space<vmem>>, vector<1x2048xf32>
    tpu.vector_store %arg2[%c0_1, %c0_2], %2 {strides = array<i32>} : memref<1x2048xf32, #tpu.memory_space<vmem>>, vector<1x2048xf32>,
    return
  }
  func.func @transform_0(%arg0: i32) -> (i32, i32) {
    %c0_i32 = arith.constant 0 : i32
    %c0_i32_0 = arith.constant 0 : i32
    return %arg0, %c0_i32 : i32, i32
  }
  func.func @transform_1(%arg0: i32) -> (i32, i32) {
    %c0_i32 = arith.constant 0 : i32
    %c0_i32_0 = arith.constant 0 : i32
    return %arg0, %c0_i32 : i32, i32
  }
}

</mosaic_0001>

<llo_original>
// kernel: tpu_custom_call.1
$region0: #{tpu_custom_call.1}
  #allocation0 [shape = 'u32[]', space=smem, size = 0x4, offset = 0x4, fixed_abs, tag = 'smem constant byte address 0x4 - core index']
  #allocation1 [shape = 'u32[144,128]{1,0:T(1,128)}', space=vmem, size = 0x12000, scoped, tag = 'internal scratch']
  %s0 = inlined_call_operand.hbm [shape: f32[1,2048], index: 0, kind: input, shape index: {}]
  %s1 = inlined_call_operand.hbm [shape: f32[1,2048], index: 1, kind: output, shape index: {}]
  %s2 = sld [smem:[#allocation0]]
  $region18: #{tpu_custom_call.1} parent=0
    _
  %s4 = ssub.s32 1, %s2
  %s5 = scalar_select 0, %s4, %s2
  $region1: #{tpu_custom_call.1} parent=0
    #allocation2 [shape = 'u8[8192]{0}', space=vmem, size = 0x2000, scoped, tag = 'input window, operand 0, single buffered']
    #allocation3 [shape = 's32[1]{0}', space=sflag, size = 0x4, scoped, tag = 'scoped memory for tpu_custom_call.1']
    #allocation4 [shape = 's32[1]{0}', space=sflag, size = 0x4, scoped, tag = 'scoped memory for tpu_custom_call.1']
    #allocation5 [shape = 'u8[8192]{0}', space=vmem, size = 0x2000, scoped, tag = 'output window, operand 0, single buffered']
    %6 = vsyncpa [#allocation3], 0
    %7 = vsyncpa [#allocation4], 0
    // Predicated region
    $region2: #{tpu_custom_call.1} parent=1 // pred_check
      _
    $region3: #{tpu_custom_call.1} parent=1 // pred_check_branch
      %9 = sbr.rel (0) target = $region5
    $region4: #{tpu_custom_call.1} parent=1 // pred_region
      %s11 = ssub.s32 256, 256
      %12 = vsyncadd [#allocation3], %s11
      %s14 = sshll.u32 [#allocation2], 4
      %s15 = int_to_ptr.vmem [resolvable:$true] %s14
      %17 = dma.hbm_to_vmem [thread:$0]  %s0, 256, %s15, [#allocation3]
    $region5: #{tpu_custom_call.1} parent=1 // pred_fallthru
      _
    // Predicated region
    $region6: #{tpu_custom_call.1} parent=1 // pred_check
      _
    $region7: #{tpu_custom_call.1} parent=1 // pred_check_branch
      %19 = sbr.rel (0) target = $region9
    $region8: #{tpu_custom_call.1} parent=1 // pred_region
      %20 = dma.done [#allocation3], 256
    $region9: #{tpu_custom_call.1} parent=1 // pred_fallthru
      _
    %v21 = vld [vmem:[#allocation2] sm:$0xff]
    %v22 = vld [vmem:[#allocation2 + $0x8] sm:$0xff]
    %v23 = vmul.f32 %v21, 5.0
    %v24 = vmul.f32 %v22, 5.0
    %25 = vst [vmem:[#allocation5] sm:$0xff] %v23
    %26 = vst [vmem:[#allocation5 + $0x8] sm:$0xff] %v24
    // Predicated region
    $region10: #{tpu_custom_call.1} parent=1 // pred_check
      _
    $region11: #{tpu_custom_call.1} parent=1 // pred_check_branch
      %28 = sbr.rel (0) target = $region13
    $region12: #{tpu_custom_call.1} parent=1 // pred_region
      %s30 = ssub.s32 256, 256
      %31 = vsyncadd [#allocation4], %s30
      %s33 = sshll.u32 [#allocation5], 4
      %s34 = int_to_ptr.vmem [resolvable:$true] %s33
      %36 = dma.vmem_to_hbm [thread:$0]  %s34, 256, %s1, [#allocation4]
    $region13: #{tpu_custom_call.1} parent=1 // pred_fallthru
      _
    // Predicated region
    $region14: #{tpu_custom_call.1} parent=1 // pred_check
      _
    $region15: #{tpu_custom_call.1} parent=1 // pred_check_branch
      %38 = sbr.rel (0) target = $region17
    $region16: #{tpu_custom_call.1} parent=1 // pred_region
      %39 = dma.done [#allocation4], 256
    $region17: #{tpu_custom_call.1} parent=1 // pred_fallthru
      _
    %40 = vsyncpa [#allocation3], 1
    %41 = vsyncpa [#allocation4], 1

</llo_original>
